<compile_context>
chip_gen: v6e
topology: v6e:2x2x1
jax: 0.10.0
libtpu: 0.0.40
codegen_flags: <defaults>
</compile_context>

<pallas_src>
import math

import jax
import jax.numpy as jnp
from jax.experimental import pallas as pl
from jax.experimental.pallas import tpu as pltpu


def _mlp_kernel(x_ref, w1_ref, b1_ref, w2_ref, b2_ref, w3_ref, b3_ref, o_ref):
    # x_ref: (3, TB)   batch on lanes.
    x = x_ref[...]
    # Layer 1: (30, 3) @ (3, TB) + (30, 1) -> tanh         -> (30, TB)
    h1 = jnp.tanh(
        jnp.dot(w1_ref[...], x, preferred_element_type=jnp.float32) + b1_ref[...]
    )
    # Layer 2: (210, 30) @ (30, TB) + (210, 1) -> tanh     -> (210, TB)
    h2 = jnp.tanh(
        jnp.dot(w2_ref[...], h1, preferred_element_type=jnp.float32) + b2_ref[...]
    )
    # Layer 3 (no activation): (1, 210) @ (210, TB) + (1, 1) -> (1, TB)
    o_ref[...] = (
        jnp.dot(w3_ref[...], h2, preferred_element_type=jnp.float32) + b3_ref[...]
    ).astype(o_ref.dtype)


def l2_forward(x, params, *, tile_b=2048):
    """Fused forward pass of the L2 MLP.

    x: (N, 3) float (PyTorch row-major convention).
    params: dict with w1 (30,3), b1 (30,1), w2 (210,30), b2 (210,1),
            w3 (1,210), b3 (1,1)   -- PyTorch (out_features, in_features).
    Returns (N, 1) float32.
    """
    n, f_in = x.shape
    assert f_in == 3, f"L2 expects 3 input features, got {f_in}"

    # Adaptive lane tile: multiple of 128, no larger than needed for small N,
    # capped at tile_b so intermediates ((210, tile) f32) stay comfortably in
    # VMEM/vregs while the ~0.35 us per-grid-step overhead is amortized.
    tile_b = max(128, (tile_b // 128) * 128)
    n_lane = pl.cdiv(n, 128) * 128
    tile = min(tile_b, n_lane)
    n_pad = pl.cdiv(n, tile) * tile
    grid = (n_pad // tile,)

    # Pad + transpose to a (3, n_pad) lane-dense slab (single fused XLA copy).
    x_f32 = x.astype(jnp.float32)
    xt = jnp.pad(x_f32, ((0, n_pad - n), (0, 0))).T

    w1, b1 = params["w1"], params["b1"]
    w2, b2 = params["w2"], params["b2"]
    w3, b3 = params["w3"], params["b3"]

    # Constant-index full blocks: resident in VMEM for the whole grid.
    def full(shape):
        return pl.BlockSpec(shape, lambda i: (0, 0))

    out_t = pl.pallas_call(
        _mlp_kernel,
        out_shape=jax.ShapeDtypeStruct((1, n_pad), jnp.float32),
        grid_spec=pltpu.PrefetchScalarGridSpec(
            num_scalar_prefetch=0,
            grid=grid,
            in_specs=[
                pl.BlockSpec((3, tile), lambda i: (0, i)),   # x tile (lane-dense)
                full(w1.shape), full(b1.shape),
                full(w2.shape), full(b2.shape),
                full(w3.shape), full(b3.shape),
            ],
            out_specs=pl.BlockSpec((1, tile), lambda i: (0, i)),  # lane-dense out
        ),
        compiler_params=pltpu.CompilerParams(
            dimension_semantics=("parallel",),   # megacore-shardable batch axis
        ),
    )(xt, w1, b1, w2, b2, w3, b3)

    # (1, n_pad) -> (N, 1), dropping the pad columns.
    return out_t[:, :n].T


def init_params(key):
    """Deterministic init mimicking nn.Linear default (uniform +/- 1/sqrt(fan_in)).

    Weights in PyTorch layout (out_features, in_features); biases as
    (out_features, 1) columns so they broadcast over the lane (batch) axis.
    """
    dims = [(3, 30), (30, 210), (210, 1)]
    params = {}
    keys = jax.random.split(key, 2 * len(dims))
    for idx, (fan_in, fan_out) in enumerate(dims):
        bound = 1.0 / math.sqrt(fan_in)
        w = jax.random.uniform(
            keys[2 * idx], (fan_out, fan_in), jnp.float32, -bound, bound
        )
        b = jax.random.uniform(
            keys[2 * idx + 1], (fan_out, 1), jnp.float32, -bound, bound
        )
        params[f"w{idx + 1}"] = w
        params[f"b{idx + 1}"] = b
    return params


def l2_reference(x, params):
    h = jnp.tanh(x @ params["w1"].T + params["b1"].T)
    h = jnp.tanh(h @ params["w2"].T + params["b2"].T)
    return h @ params["w3"].T + params["b3"].T


if __name__ == "__main__":
    key = jax.random.PRNGKey(0)
    pkey, xkey = jax.random.split(key)
    params = init_params(pkey)

    # Small, non-multiple-of-128 batch exercises the adaptive-tile + pad path.
    N = 257
    x = jax.random.normal(xkey, (N, 3), dtype=jnp.float32)

    out = l2_forward(x, params)
    out = jax.block_until_ready(out)

    ref = l2_reference(x, params)
    assert out.shape == (N, 1), f"bad output shape {out.shape}"
    assert jnp.allclose(out, ref, atol=1e-5, rtol=1e-5), "mismatch vs reference"

    print("KERNEL_OK")
</pallas_src>

<mosaic_0001>
module attributes {stable_mosaic.version = 11 : i64} {
  func.func @_mlp_kernel(%arg0: i32, %arg1: memref<3x384xf32, #tpu.memory_space<vmem>>, %arg2: memref<30x3xf32, #tpu.memory_space<vmem>>, %arg3: memref<30x1xf32, #tpu.memory_space<vmem>>, %arg4: memref<210x30xf32, #tpu.memory_space<vmem>>, %arg5: memref<210x1xf32, #tpu.memory_space<vmem>>, %arg6: memref<1x210xf32, #tpu.memory_space<vmem>>, %arg7: memref<1x1xf32, #tpu.memory_space<vmem>>, %arg8: memref<1x384xf32, #tpu.memory_space<vmem>>) attributes {dimension_semantics = [#tpu.dimension_semantics<parallel>], iteration_bounds = array<i64: 1>, scalar_prefetch = 0 : i64, scratch_operands = 0 : i64, tpu.core_type = #tpu.core_type<tc>, window_params = [{transform_indices = @transform_0, window_bounds = array<i64: 3, 384>}, {pipeline_mode = #tpu.pipeline_mode<synchronous>, transform_indices = @transform_1, window_bounds = array<i64: 30, 3>}, {pipeline_mode = #tpu.pipeline_mode<synchronous>, transform_indices = @transform_2, window_bounds = array<i64: 30, 1>}, {pipeline_mode = #tpu.pipeline_mode<synchronous>, transform_indices = @transform_3, window_bounds = array<i64: 210, 30>}, {pipeline_mode = #tpu.pipeline_mode<synchronous>, transform_indices = @transform_4, window_bounds = array<i64: 210, 1>}, {pipeline_mode = #tpu.pipeline_mode<synchronous>, transform_indices = @transform_5, window_bounds = array<i64: 1, 210>}, {pipeline_mode = #tpu.pipeline_mode<synchronous>, transform_indices = @transform_6, window_bounds = array<i64: 1, 1>}, {transform_indices = @transform_7, window_bounds = array<i64: 1, 384>}]} {
    %c0 = arith.constant 0 : index
    %c0_0 = arith.constant 0 : index
    %0 = vector.load %arg1[%c0, %c0_0] : memref<3x384xf32, #tpu.memory_space<vmem>>, vector<3x384xf32>
    %c0_1 = arith.constant 0 : index
    %c0_2 = arith.constant 0 : index
    %1 = vector.load %arg2[%c0_1, %c0_2] : memref<30x3xf32, #tpu.memory_space<vmem>>, vector<30x3xf32>
    %cst = arith.constant dense<0.000000e+00> : vector<30x384xf32>
    %2 = tpu.matmul %1, %0, %cst {dimension_numbers = #tpu.dot_dimension_numbers<[1], [0], [0], [1], [0, 0, 1, 1], [], []>} : vector<30x3xf32>, vector<3x384xf32>, vector<30x384xf32> -> vector<30x384xf32>
    %c0_3 = arith.constant 0 : index
    %c0_4 = arith.constant 0 : index
    %3 = vector.load %arg3[%c0_3, %c0_4] : memref<30x1xf32, #tpu.memory_space<vmem>>, vector<30x1xf32>
    %4 = vector.broadcast %3 : vector<30x1xf32> to vector<30x384xf32>
    %5 = arith.addf %2, %4 : vector<30x384xf32>
    %6 = math.tanh %5 : vector<30x384xf32>
    %c0_5 = arith.constant 0 : index
    %c0_6 = arith.constant 0 : index
    %7 = vector.load %arg4[%c0_5, %c0_6] : memref<210x30xf32, #tpu.memory_space<vmem>>, vector<210x30xf32>
    %cst_7 = arith.constant dense<0.000000e+00> : vector<210x384xf32>
    %8 = tpu.matmul %7, %6, %cst_7 {dimension_numbers = #tpu.dot_dimension_numbers<[1], [0], [0], [1], [0, 0, 1, 1], [], []>} : vector<210x30xf32>, vector<30x384xf32>, vector<210x384xf32> -> vector<210x384xf32>
    %c0_8 = arith.constant 0 : index
    %c0_9 = arith.constant 0 : index
    %9 = vector.load %arg5[%c0_8, %c0_9] : memref<210x1xf32, #tpu.memory_space<vmem>>, vector<210x1xf32>
    %10 = vector.broadcast %9 : vector<210x1xf32> to vector<210x384xf32>
    %11 = arith.addf %8, %10 : vector<210x384xf32>
    %12 = math.tanh %11 : vector<210x384xf32>
    %c0_10 = arith.constant 0 : index
    %c0_11 = arith.constant 0 : index
    %13 = vector.load %arg6[%c0_10, %c0_11] : memref<1x210xf32, #tpu.memory_space<vmem>>, vector<1x210xf32>
    %cst_12 = arith.constant dense<0.000000e+00> : vector<1x384xf32>
    %14 = tpu.matmul %13, %12, %cst_12 {dimension_numbers = #tpu.dot_dimension_numbers<[1], [0], [0], [1], [0, 0, 1, 1], [], []>} : vector<1x210xf32>, vector<210x384xf32>, vector<1x384xf32> -> vector<1x384xf32>
    %c0_13 = arith.constant 0 : index
    %c0_14 = arith.constant 0 : index
    %15 = vector.load %arg7[%c0_13, %c0_14] : memref<1x1xf32, #tpu.memory_space<vmem>>, vector<1x1xf32>
    %16 = vector.broadcast %15 : vector<1x1xf32> to vector<1x384xf32>
    %17 = arith.addf %14, %16 : vector<1x384xf32>
    %c0_15 = arith.constant 0 : index
    %c0_16 = arith.constant 0 : index
    %18 = vector.load %arg8[%c0_15, %c0_16] : memref<1x384xf32, #tpu.memory_space<vmem>>, vector<1x384xf32>
    tpu.vector_store %arg8[%c0_15, %c0_16], %17 {strides = array<i32>} : memref<1x384xf32, #tpu.memory_space<vmem>>, vector<1x384xf32>,
    return
  }
  func.func @transform_0(%arg0: i32) -> (i32, i32) {
    %c0_i32 = arith.constant 0 : i32
    %c0_i32_0 = arith.constant 0 : i32
    return %c0_i32, %arg0 : i32, i32
  }
  func.func @transform_1(%arg0: i32) -> (i32, i32) {
    %c0_i32 = arith.constant 0 : i32
    %c0_i32_0 = arith.constant 0 : i32
    %c0_i32_1 = arith.constant 0 : i32
    return %c0_i32, %c0_i32_0 : i32, i32
  }
  func.func @transform_2(%arg0: i32) -> (i32, i32) {
    %c0_i32 = arith.constant 0 : i32
    %c0_i32_0 = arith.constant 0 : i32
    %c0_i32_1 = arith.constant 0 : i32
    return %c0_i32, %c0_i32_0 : i32, i32
  }
  func.func @transform_3(%arg0: i32) -> (i32, i32) {
    %c0_i32 = arith.constant 0 : i32
    %c0_i32_0 = arith.constant 0 : i32
    %c0_i32_1 = arith.constant 0 : i32
    return %c0_i32, %c0_i32_0 : i32, i32
  }
  func.func @transform_4(%arg0: i32) -> (i32, i32) {
    %c0_i32 = arith.constant 0 : i32
    %c0_i32_0 = arith.constant 0 : i32
    %c0_i32_1 = arith.constant 0 : i32
    return %c0_i32, %c0_i32_0 : i32, i32
  }
  func.func @transform_5(%arg0: i32) -> (i32, i32) {
    %c0_i32 = arith.constant 0 : i32
    %c0_i32_0 = arith.constant 0 : i32
    %c0_i32_1 = arith.constant 0 : i32
    return %c0_i32, %c0_i32_0 : i32, i32
  }
  func.func @transform_6(%arg0: i32) -> (i32, i32) {
    %c0_i32 = arith.constant 0 : i32
    %c0_i32_0 = arith.constant 0 : i32
    %c0_i32_1 = arith.constant 0 : i32
    return %c0_i32, %c0_i32_0 : i32, i32
  }
  func.func @transform_7(%arg0: i32) -> (i32, i32) {
    %c0_i32 = arith.constant 0 : i32
    %c0_i32_0 = arith.constant 0 : i32
    return %c0_i32, %arg0 : i32, i32
  }
}

</mosaic_0001>

<llo_original>
// kernel: tpu_custom_call.1
$region0: #{tpu_custom_call.1}
  #allocation0 [shape = 'u32[]', space=smem, size = 0x4, offset = 0x4, fixed_abs, tag = 'smem constant byte address 0x4 - core index']
  #allocation1 [shape = 'u32[144,128]{1,0:T(1,128)}', space=vmem, size = 0x12000, scoped, tag = 'internal scratch']
  #allocation2 [shape = 'f32[1,1]{1,0:T(1,128)S(1)}', space=vmem, size = 0x200, scoped, tag = 'scoped memory for tpu_custom_call.1']
  %s0 = inlined_call_operand.vmem [shape: f32[3,384], index: 0, kind: input, shape index: {}]
  %s1 = inlined_call_operand.vmem [shape: f32[30,3], index: 1, kind: input, shape index: {}]
  %s2 = inlined_call_operand.vmem [shape: f32[30,1], index: 2, kind: input, shape index: {}]
  %s3 = inlined_call_operand.vmem [shape: f32[210,30], index: 3, kind: input, shape index: {}]
  %s4 = inlined_call_operand.vmem [shape: f32[210,1], index: 4, kind: input, shape index: {}]
  %s5 = inlined_call_operand.vmem [shape: f32[1,210], index: 5, kind: input, shape index: {}]
  %s6 = inlined_call_operand.<no memory space> [shape: f32[1,1], index: 6, kind: input, shape index: {}]
  %s7 = inlined_call_operand.hbm [shape: f32[1,384], index: 7, kind: output, shape index: {}]
  %s8 = sld [smem:[#allocation0]]
  $region38: #{tpu_custom_call.1} parent=0
    _
  %s10 = ssub.s32 1, %s8
  %s11 = scalar_select 0, %s10, %s8
  %v12 = vstv %s6
  %13 = vst [vmem:[#allocation2] sm:$0x1] %v12
  $region1: #{tpu_custom_call.1} parent=0
    #allocation3 [shape = 'u8[1536]{0}', space=vmem, size = 0x800, scoped, tag = 'output window, operand 0, single buffered']
    #allocation4 [shape = 's32[1]{0}', space=sflag, size = 0x4, scoped, tag = 'scoped memory for tpu_custom_call.1']
    %14 = vsyncpa [#allocation4], 0
    // Predicated region
    $region2: #{tpu_custom_call.1} parent=1 // pred_check
      _
    $region3: #{tpu_custom_call.1} parent=1 // pred_check_branch
      %16 = sbr.rel (0) target = $region5
    $region4: #{tpu_custom_call.1} parent=1 // pred_region
      _
    $region5: #{tpu_custom_call.1} parent=1 // pred_fallthru
      _
    // Predicated region
    $region6: #{tpu_custom_call.1} parent=1 // pred_check
      _
    $region7: #{tpu_custom_call.1} parent=1 // pred_check_branch
      %18 = sbr.rel (0) target = $region9
    $region8: #{tpu_custom_call.1} parent=1 // pred_region
      _
    $region9: #{tpu_custom_call.1} parent=1 // pred_fallthru
      _
    // Predicated region
    $region10: #{tpu_custom_call.1} parent=1 // pred_check
      _
    $region11: #{tpu_custom_call.1} parent=1 // pred_check_branch
      %20 = sbr.rel (0) target = $region13
    $region12: #{tpu_custom_call.1} parent=1 // pred_region
      _
    $region13: #{tpu_custom_call.1} parent=1 // pred_fallthru
      _
    // Predicated region
    $region14: #{tpu_custom_call.1} parent=1 // pred_check
      _
    $region15: #{tpu_custom_call.1} parent=1 // pred_check_branch
      %22 = sbr.rel (0) target = $region17
    $region16: #{tpu_custom_call.1} parent=1 // pred_region
      _
    $region17: #{tpu_custom_call.1} parent=1 // pred_fallthru
      _
    // Predicated region
    $region18: #{tpu_custom_call.1} parent=1 // pred_check
      _
    $region19: #{tpu_custom_call.1} parent=1 // pred_check_branch
      %24 = sbr.rel (0) target = $region21
    $region20: #{tpu_custom_call.1} parent=1 // pred_region
      _
    $region21: #{tpu_custom_call.1} parent=1 // pred_fallthru
      _
    // Predicated region
    $region22: #{tpu_custom_call.1} parent=1 // pred_check
      _
    $region23: #{tpu_custom_call.1} parent=1 // pred_check_branch
      %26 = sbr.rel (0) target = $region25
    $region24: #{tpu_custom_call.1} parent=1 // pred_region
      _
    $region25: #{tpu_custom_call.1} parent=1 // pred_fallthru
      _
    // Predicated region
    $region26: #{tpu_custom_call.1} parent=1 // pred_check
      _
    $region27: #{tpu_custom_call.1} parent=1 // pred_check_branch
      %28 = sbr.rel (0) target = $region29
    $region28: #{tpu_custom_call.1} parent=1 // pred_region
      _
    $region29: #{tpu_custom_call.1} parent=1 // pred_fallthru
      _
    %v29 = vld [vmem:[%s0] sm:$0x77]
    %v30 = vld [vmem:[%s0 + $0x8] sm:$0x7]
    %v31 = vld [vmem:[%s1] sm:$0xff]
    %v32 = vld [vmem:[%s1 + $0x8] sm:$0xff]
    %v33 = vld [vmem:[%s1 + $0x10] sm:$0xff]
    %v34 = vld [vmem:[%s1 + $0x18] sm:$0x3f]
    %v35 = vld [vmem:[%s2] sm:$0xff]
    %v36 = vld [vmem:[%s2 + $0x8] sm:$0xff]
    %v37 = vld [vmem:[%s2 + $0x10] sm:$0xff]
    %v38 = vld [vmem:[%s2 + $0x18] sm:$0x3f]
    %40 = vset.pattern.permute.xlu0 0
    %41 = vperm.xlu0 %40, %v35
    %v42 = vpop.permute.xlu0 %41
    %45 = vset.pattern.permute.xlu0 0
    %46 = vperm.xlu0 %45, %v36
    %v47 = vpop.permute.xlu0 %46
    %50 = vset.pattern.permute.xlu0 0
    %51 = vperm.xlu0 %50, %v37
    %v52 = vpop.permute.xlu0 %51
    %55 = vset.pattern.permute.xlu0 0
    %56 = vperm.xlu0 %55, %v38
    %v57 = vpop.permute.xlu0 %56
    %v61 = vcombine.high %v29, %v29
    %vm62 = vcmask 23552
    %v64 = vsel %vm62, %v31, 0
    %v67 = vsel %vm62, %v32, 0
    %v70 = vsel %vm62, %v33, 0
    %v73 = vsel %vm62, %v34, 0
    %vm75 = vcmask 1042432
    %v76 = vsel %vm75, %v29, 0
    %v78 = vsel %vm75, %v61, 0
    %v80 = vsel %vm75, %v30, 0
    %82 = vmatprep.subr.mxu0 0.0
    %83 = vmatpush1.msra.mxu0 0.0
    %84 = vmatprep.subr.mxu0 0.0
    %85 = vmatpush1.msra.mxu0 0.0
    %86 = vmatprep.subr.mxu0 0.0
    %87 = vmatpush1.msra.mxu0 0.0
    %88 = vmatprep.subr.mxu0 0.0
    %89 = vmatpush1.msra.mxu0 0.0
    %90 = vmatprep.subr.mxu0 0.0
    %91 = vmatpush1.msra.mxu0 0.0
    %92 = vmatprep.subr.mxu0 0.0
    %93 = vmatpush1.msra.mxu0 0.0
    %94 = vmatprep.subr.mxu0 0.0
    %95 = vmatpush1.msra.mxu0 0.0
    %96 = vmatprep.subr.mxu0 0.0
    %97 = vmatpush1.msra.mxu0 0.0
    %98 = vmatprep.subr.mxu0 0.0
    %99 = vmatpush1.msra.mxu0 0.0
    %100 = vmatprep.subr.mxu0 0.0
    %101 = vmatpush1.msra.mxu0 0.0
    %102 = vmatprep.subr.mxu0 0.0
    %103 = vmatpush1.msra.mxu0 0.0
    %104 = vmatprep.subr.mxu0 0.0
    %105 = vmatpush1.msra.mxu0 0.0
    %106 = vmatprep.subr.mxu0 0.0
    %107 = vmatpush1.msra.mxu0 0.0
    %108 = vmatprep.subr.mxu0 0.0
    %109 = vmatpush1.msra.mxu0 0.0
    %110 = vmatprep.subr.mxu0 0.0
    %111 = vmatpush1.msra.mxu0 0.0
    %112 = vmatprep.subr.mxu0 %v78
    %113 = vmatpush1.msra.mxu0 %v76
    %114 = vmatprep.subr.mxu0 0.0
    %115 = vmatpush2.msra.mxu0 0.0
    %116 = vmatprep.subr.mxu0 0.0
    %117 = vmatpush2.msra.mxu0 0.0
    %118 = vmatprep.subr.mxu0 0.0
    %119 = vmatpush2.msra.mxu0 0.0
    %120 = vmatprep.subr.mxu0 0.0
    %121 = vmatpush2.msra.mxu0 0.0
    %122 = vmatprep.subr.mxu0 0.0
    %123 = vmatpush2.msra.mxu0 0.0
    %124 = vmatprep.subr.mxu0 0.0
    %125 = vmatpush2.msra.mxu0 0.0
    %126 = vmatprep.subr.mxu0 0.0
    %127 = vmatpush2.msra.mxu0 0.0
    %128 = vmatprep.subr.mxu0 0.0
    %129 = vmatpush2.msra.mxu0 0.0
    %130 = vmatprep.subr.mxu0 0.0
    %131 = vmatpush2.msra.mxu0 0.0
    %132 = vmatprep.subr.mxu0 0.0
    %133 = vmatpush2.msra.mxu0 0.0
    %134 = vmatprep.subr.mxu0 0.0
    %135 = vmatpush2.msra.mxu0 0.0
    %136 = vmatprep.subr.mxu0 0.0
    %137 = vmatpush2.msra.mxu0 0.0
    %138 = vmatprep.subr.mxu0 0.0
    %139 = vmatpush2.msra.mxu0 0.0
    %140 = vmatprep.subr.mxu0 0.0
    %141 = vmatpush2.msra.mxu0 0.0
    %142 = vmatprep.subr.mxu0 0.0
    %143 = vmatpush2.msra.mxu0 0.0
    %144 = vmatprep.subr.mxu0 0.0
    %145 = vmatpush2.msra.mxu0 0.0
    %146 = vmatprep.mubr.f32.mxu0 0.0
    %147 = vmatmul.mubr.f32.gmra.mxu0 %v64
    %v148 = vpop.f32.mrf.mxu0
    %v149 = vadd.f32 %v42, %v148
    %v150 = vpop.f32.mrf.mxu0
    %v151 = vadd.f32 %v42, %v150
    %152 = vmatprep.mubr.f32.mxu0 0.0
    %153 = vmatmul.mubr.f32.gmra.mxu0 %v67
    %v154 = vpop.f32.mrf.mxu0
    %v155 = vadd.f32 %v47, %v154
    %v156 = vpop.f32.mrf.mxu0
    %v157 = vadd.f32 %v47, %v156
    %158 = vmatprep.mubr.f32.mxu0 0.0
    %159 = vmatmul.mubr.f32.gmra.mxu0 %v70
    %v160 = vpop.f32.mrf.mxu0
    %v161 = vadd.f32 %v52, %v160
    %v162 = vpop.f32.mrf.mxu0
    %v163 = vadd.f32 %v52, %v162
    %164 = vmatprep.mubr.f32.mxu0 0.0
    %165 = vmatmul.mubr.f32.gmra.mxu0 %v73
    %v166 = vpop.f32.mrf.mxu0
    %v167 = vadd.f32 %v57, %v166
    %v168 = vpop.f32.mrf.mxu0
    %v169 = vadd.f32 %v57, %v168
    %170 = vdwg.mxu0
    %171 = vmatprep.subr.mxu0 0.0
    %172 = vmatpush1.msra.mxu0 0.0
    %173 = vmatprep.subr.mxu0 0.0
    %174 = vmatpush1.msra.mxu0 0.0
    %175 = vmatprep.subr.mxu0 0.0
    %176 = vmatpush1.msra.mxu0 0.0
    %177 = vmatprep.subr.mxu0 0.0
    %178 = vmatpush1.msra.mxu0 0.0
    %179 = vmatprep.subr.mxu0 0.0
    %180 = vmatpush1.msra.mxu0 0.0
    %181 = vmatprep.subr.mxu0 0.0
    %182 = vmatpush1.msra.mxu0 0.0
    %183 = vmatprep.subr.mxu0 0.0
    %184 = vmatpush1.msra.mxu0 0.0
    %185 = vmatprep.subr.mxu0 0.0
    %186 = vmatpush1.msra.mxu0 0.0
    %187 = vmatprep.subr.mxu0 0.0
    %188 = vmatpush1.msra.mxu0 0.0
    %189 = vmatprep.subr.mxu0 0.0
    %190 = vmatpush1.msra.mxu0 0.0
    %191 = vmatprep.subr.mxu0 0.0
    %192 = vmatpush1.msra.mxu0 0.0
    %193 = vmatprep.subr.mxu0 0.0
    %194 = vmatpush1.msra.mxu0 0.0
    %195 = vmatprep.subr.mxu0 0.0
    %196 = vmatpush1.msra.mxu0 0.0
    %197 = vmatprep.subr.mxu0 0.0
    %198 = vmatpush1.msra.mxu0 0.0
    %199 = vmatprep.subr.mxu0 0.0
    %200 = vmatpush1.msra.mxu0 0.0
    %201 = vmatprep.subr.mxu0 0.0
    %202 = vmatpush1.msra.mxu0 %v80
    %203 = vmatprep.subr.mxu0 0.0
    %204 = vmatpush2.msra.mxu0 0.0
    %205 = vmatprep.subr.mxu0 0.0
    %206 = vmatpush2.msra.mxu0 0.0
    %207 = vmatprep.subr.mxu0 0.0
    %208 = vmatpush2.msra.mxu0 0.0
    %209 = vmatprep.subr.mxu0 0.0
    %210 = vmatpush2.msra.mxu0 0.0
    %211 = vmatprep.subr.mxu0 0.0
    %212 = vmatpush2.msra.mxu0 0.0
    %213 = vmatprep.subr.mxu0 0.0
    %214 = vmatpush2.msra.mxu0 0.0
    %215 = vmatprep.subr.mxu0 0.0
    %216 = vmatpush2.msra.mxu0 0.0
    %217 = vmatprep.subr.mxu0 0.0
    %218 = vmatpush2.msra.mxu0 0.0
    %219 = vmatprep.subr.mxu0 0.0
    %220 = vmatpush2.msra.mxu0 0.0
    %221 = vmatprep.subr.mxu0 0.0
    %222 = vmatpush2.msra.mxu0 0.0
    %223 = vmatprep.subr.mxu0 0.0
    %224 = vmatpush2.msra.mxu0 0.0
    %225 = vmatprep.subr.mxu0 0.0
    %226 = vmatpush2.msra.mxu0 0.0
    %227 = vmatprep.subr.mxu0 0.0
    %228 = vmatpush2.msra.mxu0 0.0
    %229 = vmatprep.subr.mxu0 0.0
    %230 = vmatpush2.msra.mxu0 0.0
    %231 = vmatprep.subr.mxu0 0.0
    %232 = vmatpush2.msra.mxu0 0.0
    %233 = vmatprep.subr.mxu0 0.0
    %234 = vmatpush2.msra.mxu0 0.0
    %235 = vmatprep.mubr.f32.mxu0 0.0
    %236 = vmatmul.mubr.f32.gmra.mxu0 %v64
    %v237 = vpop.f32.mrf.mxu0
    %v238 = vadd.f32 %v42, %v237
    %v239 = vpop.f32.mrf.mxu0
    %240 = vmatprep.mubr.f32.mxu0 0.0
    %241 = vmatmul.mubr.f32.gmra.mxu0 %v67
    %v242 = vpop.f32.mrf.mxu0
    %v243 = vadd.f32 %v47, %v242
    %v244 = vpop.f32.mrf.mxu0
    %245 = vmatprep.mubr.f32.mxu0 0.0
    %246 = vmatmul.mubr.f32.gmra.mxu0 %v70
    %v247 = vpop.f32.mrf.mxu0
    %v248 = vadd.f32 %v52, %v247
    %v249 = vpop.f32.mrf.mxu0
    %250 = vmatprep.mubr.f32.mxu0 0.0
    %251 = vmatmul.mubr.f32.gmra.mxu0 %v73
    %v252 = vpop.f32.mrf.mxu0
    %v253 = vadd.f32 %v57, %v252
    %v254 = vpop.f32.mrf.mxu0
    %255 = vdwg.mxu0
    %v256 = vtanh.pop %v149
    %v257 = vtanh.pop %v151
    %v258 = vtanh.pop %v238
    %v259 = vtanh.pop %v155
    %v260 = vtanh.pop %v157
    %v261 = vtanh.pop %v243
    %v262 = vtanh.pop %v161
    %v263 = vtanh.pop %v163
    %v264 = vtanh.pop %v248
    %v265 = vtanh.pop %v167
    %v266 = vtanh.pop %v169
    %v267 = vtanh.pop %v253
    %v268 = vld [vmem:[%s3] sm:$0xff]
    %v269 = vld [vmem:[%s3 + $0x8] sm:$0xff]
    %v270 = vld [vmem:[%s3 + $0x10] sm:$0xff]
    %v271 = vld [vmem:[%s3 + $0x18] sm:$0xff]
    %v272 = vld [vmem:[%s3 + $0x20] sm:$0xff]
    %v273 = vld [vmem:[%s3 + $0x28] sm:$0xff]
    %v274 = vld [vmem:[%s3 + $0x30] sm:$0xff]
    %v275 = vld [vmem:[%s3 + $0x38] sm:$0xff]
    %v276 = vld [vmem:[%s3 + $0x40] sm:$0xff]
    %v277 = vld [vmem:[%s3 + $0x48] sm:$0xff]
    %v278 = vld [vmem:[%s3 + $0x50] sm:$0xff]
    %v279 = vld [vmem:[%s3 + $0x58] sm:$0xff]
    %v280 = vld [vmem:[%s3 + $0x60] sm:$0xff]
    %v281 = vld [vmem:[%s3 + $0x68] sm:$0xff]
    %v282 = vld [vmem:[%s3 + $0x70] sm:$0xff]
    %v283 = vld [vmem:[%s3 + $0x78] sm:$0xff]
    %v284 = vld [vmem:[%s3 + $0x80] sm:$0xff]
    %v285 = vld [vmem:[%s3 + $0x88] sm:$0xff]
    %v286 = vld [vmem:[%s3 + $0x90] sm:$0xff]
    %v287 = vld [vmem:[%s3 + $0x98] sm:$0xff]
    %v288 = vld [vmem:[%s3 + $0xa0] sm:$0xff]
    %v289 = vld [vmem:[%s3 + $0xa8] sm:$0xff]
    %v290 = vld [vmem:[%s3 + $0xb0] sm:$0xff]
    %v291 = vld [vmem:[%s3 + $0xb8] sm:$0xff]
    %v292 = vld [vmem:[%s3 + $0xc0] sm:$0xff]
    %v293 = vld [vmem:[%s3 + $0xc8] sm:$0xff]
    %v294 = vld [vmem:[%s3 + $0xd0] sm:$0x3]
    %v295 = vld [vmem:[%s4] sm:$0xff]
    %v296 = vld [vmem:[%s4 + $0x8] sm:$0xff]
    %v297 = vld [vmem:[%s4 + $0x10] sm:$0xff]
    %v298 = vld [vmem:[%s4 + $0x18] sm:$0xff]
    %v299 = vld [vmem:[%s4 + $0x20] sm:$0xff]
    %v300 = vld [vmem:[%s4 + $0x28] sm:$0xff]
    %v301 = vld [vmem:[%s4 + $0x30] sm:$0xff]
    %v302 = vld [vmem:[%s4 + $0x38] sm:$0xff]
    %v303 = vld [vmem:[%s4 + $0x40] sm:$0xff]
    %v304 = vld [vmem:[%s4 + $0x48] sm:$0xff]
    %v305 = vld [vmem:[%s4 + $0x50] sm:$0xff]
    %v306 = vld [vmem:[%s4 + $0x58] sm:$0xff]
    %v307 = vld [vmem:[%s4 + $0x60] sm:$0xff]
    %v308 = vld [vmem:[%s4 + $0x68] sm:$0xff]
    %v309 = vld [vmem:[%s4 + $0x70] sm:$0xff]
    %v310 = vld [vmem:[%s4 + $0x78] sm:$0xff]
    %v311 = vld [vmem:[%s4 + $0x80] sm:$0xff]
    %v312 = vld [vmem:[%s4 + $0x88] sm:$0xff]
    %v313 = vld [vmem:[%s4 + $0x90] sm:$0xff]
    %v314 = vld [vmem:[%s4 + $0x98] sm:$0xff]
    %v315 = vld [vmem:[%s4 + $0xa0] sm:$0xff]
    %v316 = vld [vmem:[%s4 + $0xa8] sm:$0xff]
    %v317 = vld [vmem:[%s4 + $0xb0] sm:$0xff]
    %v318 = vld [vmem:[%s4 + $0xb8] sm:$0xff]
    %v319 = vld [vmem:[%s4 + $0xc0] sm:$0xff]
    %v320 = vld [vmem:[%s4 + $0xc8] sm:$0xff]
    %v321 = vld [vmem:[%s4 + $0xd0] sm:$0x3]
    %323 = vset.pattern.permute.xlu0 0
    %324 = vperm.xlu0 %323, %v295
    %v325 = vpop.permute.xlu0 %324
    %328 = vset.pattern.permute.xlu0 0
    %329 = vperm.xlu0 %328, %v296
    %v330 = vpop.permute.xlu0 %329
    %333 = vset.pattern.permute.xlu0 0
    %334 = vperm.xlu0 %333, %v297
    %v335 = vpop.permute.xlu0 %334
    %338 = vset.pattern.permute.xlu0 0
    %339 = vperm.xlu0 %338, %v298
    %v340 = vpop.permute.xlu0 %339
    %343 = vset.pattern.permute.xlu0 0
    %344 = vperm.xlu0 %343, %v299
    %v345 = vpop.permute.xlu0 %344
    %348 = vset.pattern.permute.xlu0 0
    %349 = vperm.xlu0 %348, %v300
    %v350 = vpop.permute.xlu0 %349
    %353 = vset.pattern.permute.xlu0 0
    %354 = vperm.xlu0 %353, %v301
    %v355 = vpop.permute.xlu0 %354
    %358 = vset.pattern.permute.xlu0 0
    %359 = vperm.xlu0 %358, %v302
    %v360 = vpop.permute.xlu0 %359
    %363 = vset.pattern.permute.xlu0 0
    %364 = vperm.xlu0 %363, %v303
    %v365 = vpop.permute.xlu0 %364
    %368 = vset.pattern.permute.xlu0 0
    %369 = vperm.xlu0 %368, %v304
    %v370 = vpop.permute.xlu0 %369
    %373 = vset.pattern.permute.xlu0 0
    %374 = vperm.xlu0 %373, %v305
    %v375 = vpop.permute.xlu0 %374
    %378 = vset.pattern.permute.xlu0 0
    %379 = vperm.xlu0 %378, %v306
    %v380 = vpop.permute.xlu0 %379
    %383 = vset.pattern.permute.xlu0 0
    %384 = vperm.xlu0 %383, %v307
    %v385 = vpop.permute.xlu0 %384
    %388 = vset.pattern.permute.xlu0 0
    %389 = vperm.xlu0 %388, %v308
    %v390 = vpop.permute.xlu0 %389
    %393 = vset.pattern.permute.xlu0 0
    %394 = vperm.xlu0 %393, %v309
    %v395 = vpop.permute.xlu0 %394
    %398 = vset.pattern.permute.xlu0 0
    %399 = vperm.xlu0 %398, %v310
    %v400 = vpop.permute.xlu0 %399
    %403 = vset.pattern.permute.xlu0 0
    %404 = vperm.xlu0 %403, %v311
    %v405 = vpop.permute.xlu0 %404
    %408 = vset.pattern.permute.xlu0 0
    %409 = vperm.xlu0 %408, %v312
    %v410 = vpop.permute.xlu0 %409
    %413 = vset.pattern.permute.xlu0 0
    %414 = vperm.xlu0 %413, %v313
    %v415 = vpop.permute.xlu0 %414
    %418 = vset.pattern.permute.xlu0 0
    %419 = vperm.xlu0 %418, %v314
    %v420 = vpop.permute.xlu0 %419
    %423 = vset.pattern.permute.xlu0 0
    %424 = vperm.xlu0 %423, %v315
    %v425 = vpop.permute.xlu0 %424
    %428 = vset.pattern.permute.xlu0 0
    %429 = vperm.xlu0 %428, %v316
    %v430 = vpop.permute.xlu0 %429
    %433 = vset.pattern.permute.xlu0 0
    %434 = vperm.xlu0 %433, %v317
    %v435 = vpop.permute.xlu0 %434
    %438 = vset.pattern.permute.xlu0 0
    %439 = vperm.xlu0 %438, %v318
    %v440 = vpop.permute.xlu0 %439
    %443 = vset.pattern.permute.xlu0 0
    %444 = vperm.xlu0 %443, %v319
    %v445 = vpop.permute.xlu0 %444
    %448 = vset.pattern.permute.xlu0 0
    %449 = vperm.xlu0 %448, %v320
    %v450 = vpop.permute.xlu0 %449
    %453 = vset.pattern.permute.xlu0 0
    %454 = vperm.xlu0 %453, %v321
    %v455 = vpop.permute.xlu0 %454
    %vm457 = vcmask 244736
    %v459 = vsel %vm457, %v268, 0
    %v462 = vsel %vm457, %v269, 0
    %v465 = vsel %vm457, %v270, 0
    %v468 = vsel %vm457, %v271, 0
    %v471 = vsel %vm457, %v272, 0
    %v474 = vsel %vm457, %v273, 0
    %v477 = vsel %vm457, %v274, 0
    %v480 = vsel %vm457, %v275, 0
    %v483 = vsel %vm457, %v276, 0
    %v486 = vsel %vm457, %v277, 0
    %v489 = vsel %vm457, %v278, 0
    %v492 = vsel %vm457, %v279, 0
    %v495 = vsel %vm457, %v280, 0
    %v498 = vsel %vm457, %v281, 0
    %v501 = vsel %vm457, %v282, 0
    %v504 = vsel %vm457, %v283, 0
    %v507 = vsel %vm457, %v284, 0
    %v510 = vsel %vm457, %v285, 0
    %v513 = vsel %vm457, %v286, 0
    %v516 = vsel %vm457, %v287, 0
    %v519 = vsel %vm457, %v288, 0
    %v522 = vsel %vm457, %v289, 0
    %v525 = vsel %vm457, %v290, 0
    %v528 = vsel %vm457, %v291, 0
    %v531 = vsel %vm457, %v292, 0
    %v534 = vsel %vm457, %v293, 0
    %v537 = vsel %vm457, %v294, 0
    %vm539 = vcmask 1045504
    %v541 = vsel %vm539, %v265, 0
    %v544 = vsel %vm539, %v266, 0
    %v547 = vsel %vm539, %v267, 0
    %549 = vmatprep.subr.mxu0 0.0
    %550 = vmatpush1.msra.mxu0 0.0
    %551 = vmatprep.subr.mxu0 0.0
    %552 = vmatpush1.msra.mxu0 0.0
    %553 = vmatprep.subr.mxu0 0.0
    %554 = vmatpush1.msra.mxu0 0.0
    %555 = vmatprep.subr.mxu0 0.0
    %556 = vmatpush1.msra.mxu0 0.0
    %557 = vmatprep.subr.mxu0 0.0
    %558 = vmatpush1.msra.mxu0 0.0
    %559 = vmatprep.subr.mxu0 0.0
    %560 = vmatpush1.msra.mxu0 0.0
    %561 = vmatprep.subr.mxu0 0.0
    %562 = vmatpush1.msra.mxu0 0.0
    %563 = vmatprep.subr.mxu0 0.0
    %564 = vmatpush1.msra.mxu0 0.0
    %565 = vmatprep.subr.mxu0 0.0
    %566 = vmatpush1.msra.mxu0 0.0
    %567 = vmatprep.subr.mxu0 0.0
    %568 = vmatpush1.msra.mxu0 0.0
    %569 = vmatprep.subr.mxu0 0.0
    %570 = vmatpush1.msra.mxu0 0.0
    %571 = vmatprep.subr.mxu0 0.0
    %572 = vmatpush1.msra.mxu0 0.0
    %573 = vmatprep.subr.mxu0 %v544
    %574 = vmatpush1.msra.mxu0 %v541
    %575 = vmatprep.subr.mxu0 %v263
    %576 = vmatpush1.msra.mxu0 %v262
    %577 = vmatprep.subr.mxu0 %v260
    %578 = vmatpush1.msra.mxu0 %v259
    %579 = vmatprep.subr.mxu0 %v257
    %580 = vmatpush1.msra.mxu0 %v256
    %581 = vmatprep.subr.mxu0 0.0
    %582 = vmatpush2.msra.mxu0 0.0
    %583 = vmatprep.subr.mxu0 0.0
    %584 = vmatpush2.msra.mxu0 0.0
    %585 = vmatprep.subr.mxu0 0.0
    %586 = vmatpush2.msra.mxu0 0.0
    %587 = vmatprep.subr.mxu0 0.0
    %588 = vmatpush2.msra.mxu0 0.0
    %589 = vmatprep.subr.mxu0 0.0
    %590 = vmatpush2.msra.mxu0 0.0
    %591 = vmatprep.subr.mxu0 0.0
    %592 = vmatpush2.msra.mxu0 0.0
    %593 = vmatprep.subr.mxu0 0.0
    %594 = vmatpush2.msra.mxu0 0.0
    %595 = vmatprep.subr.mxu0 0.0
    %596 = vmatpush2.msra.mxu0 0.0
    %597 = vmatprep.subr.mxu0 0.0
    %598 = vmatpush2.msra.mxu0 0.0
    %599 = vmatprep.subr.mxu0 0.0
    %600 = vmatpush2.msra.mxu0 0.0
    %601 = vmatprep.subr.mxu0 0.0
    %602 = vmatpush2.msra.mxu0 0.0
    %603 = vmatprep.subr.mxu0 0.0
    %604 = vmatpush2.msra.mxu0 0.0
    %605 = vmatprep.subr.mxu0 0.0
    %606 = vmatpush2.msra.mxu0 0.0
    %607 = vmatprep.subr.mxu0 0.0
    %608 = vmatpush2.msra.mxu0 0.0
    %609 = vmatprep.subr.mxu0 0.0
    %610 = vmatpush2.msra.mxu0 0.0
    %611 = vmatprep.subr.mxu0 0.0
    %612 = vmatpush2.msra.mxu0 0.0
    %613 = vmatprep.mubr.f32.mxu0 0.0
    %614 = vmatmul.mubr.f32.gmra.mxu0 %v459
    %v615 = vpop.f32.mrf.mxu0
    %v616 = vadd.f32 %v325, %v615
    %v617 = vpop.f32.mrf.mxu0
    %v618 = vadd.f32 %v325, %v617
    %619 = vmatprep.mubr.f32.mxu0 0.0
    %620 = vmatmul.mubr.f32.gmra.mxu0 %v462
    %v621 = vpop.f32.mrf.mxu0
    %v622 = vadd.f32 %v330, %v621
    %v623 = vpop.f32.mrf.mxu0
    %v624 = vadd.f32 %v330, %v623
    %625 = vmatprep.mubr.f32.mxu0 0.0
    %626 = vmatmul.mubr.f32.gmra.mxu0 %v465
    %v627 = vpop.f32.mrf.mxu0
    %v628 = vadd.f32 %v335, %v627
    %v629 = vpop.f32.mrf.mxu0
    %v630 = vadd.f32 %v335, %v629
    %631 = vmatprep.mubr.f32.mxu0 0.0
    %632 = vmatmul.mubr.f32.gmra.mxu0 %v468
    %v633 = vpop.f32.mrf.mxu0
    %v634 = vadd.f32 %v340, %v633
    %v635 = vpop.f32.mrf.mxu0
    %v636 = vadd.f32 %v340, %v635
    %637 = vmatprep.mubr.f32.mxu0 0.0
    %638 = vmatmul.mubr.f32.gmra.mxu0 %v471
    %v639 = vpop.f32.mrf.mxu0
    %v640 = vadd.f32 %v345, %v639
    %v641 = vpop.f32.mrf.mxu0
    %v642 = vadd.f32 %v345, %v641
    %643 = vmatprep.mubr.f32.mxu0 0.0
    %644 = vmatmul.mubr.f32.gmra.mxu0 %v474
    %v645 = vpop.f32.mrf.mxu0
    %v646 = vadd.f32 %v350, %v645
    %v647 = vpop.f32.mrf.mxu0
    %v648 = vadd.f32 %v350, %v647
    %649 = vmatprep.mubr.f32.mxu0 0.0
    %650 = vmatmul.mubr.f32.gmra.mxu0 %v477
    %v651 = vpop.f32.mrf.mxu0
    %v652 = vadd.f32 %v355, %v651
    %v653 = vpop.f32.mrf.mxu0
    %v654 = vadd.f32 %v355, %v653
    %655 = vmatprep.mubr.f32.mxu0 0.0
    %656 = vmatmul.mubr.f32.gmra.mxu0 %v480
    %v657 = vpop.f32.mrf.mxu0
    %v658 = vadd.f32 %v360, %v657
    %v659 = vpop.f32.mrf.mxu0
    %v660 = vadd.f32 %v360, %v659
    %661 = vmatprep.mubr.f32.mxu0 0.0
    %662 = vmatmul.mubr.f32.gmra.mxu0 %v483
    %v663 = vpop.f32.mrf.mxu0
    %v664 = vadd.f32 %v365, %v663
    %v665 = vpop.f32.mrf.mxu0
    %v666 = vadd.f32 %v365, %v665
    %667 = vmatprep.mubr.f32.mxu0 0.0
    %668 = vmatmul.mubr.f32.gmra.mxu0 %v486
    %v669 = vpop.f32.mrf.mxu0
    %v670 = vadd.f32 %v370, %v669
    %v671 = vpop.f32.mrf.mxu0
    %v672 = vadd.f32 %v370, %v671
    %673 = vmatprep.mubr.f32.mxu0 0.0
    %674 = vmatmul.mubr.f32.gmra.mxu0 %v489
    %v675 = vpop.f32.mrf.mxu0
    %v676 = vadd.f32 %v375, %v675
    %v677 = vpop.f32.mrf.mxu0
    %v678 = vadd.f32 %v375, %v677
    %679 = vmatprep.mubr.f32.mxu0 0.0
    %680 = vmatmul.mubr.f32.gmra.mxu0 %v492
    %v681 = vpop.f32.mrf.mxu0
    %v682 = vadd.f32 %v380, %v681
    %v683 = vpop.f32.mrf.mxu0
    %v684 = vadd.f32 %v380, %v683
    %685 = vmatprep.mubr.f32.mxu0 0.0
    %686 = vmatmul.mubr.f32.gmra.mxu0 %v495
    %v687 = vpop.f32.mrf.mxu0
    %v688 = vadd.f32 %v385, %v687
    %v689 = vpop.f32.mrf.mxu0
    %v690 = vadd.f32 %v385, %v689
    %691 = vmatprep.mubr.f32.mxu0 0.0
    %692 = vmatmul.mubr.f32.gmra.mxu0 %v498
    %v693 = vpop.f32.mrf.mxu0
    %v694 = vadd.f32 %v390, %v693
    %v695 = vpop.f32.mrf.mxu0
    %v696 = vadd.f32 %v390, %v695
    %697 = vmatprep.mubr.f32.mxu0 0.0
    %698 = vmatmul.mubr.f32.gmra.mxu0 %v501
    %v699 = vpop.f32.mrf.mxu0
    %v700 = vadd.f32 %v395, %v699
    %v701 = vpop.f32.mrf.mxu0
    %v702 = vadd.f32 %v395, %v701
    %703 = vmatprep.mubr.f32.mxu0 0.0
    %704 = vmatmul.mubr.f32.gmra.mxu0 %v504
    %v705 = vpop.f32.mrf.mxu0
    %v706 = vadd.f32 %v400, %v705
    %v707 = vpop.f32.mrf.mxu0
    %v708 = vadd.f32 %v400, %v707
    %709 = vmatprep.mubr.f32.mxu0 0.0
    %710 = vmatmul.mubr.f32.gmra.mxu0 %v507
    %v711 = vpop.f32.mrf.mxu0
    %v712 = vadd.f32 %v405, %v711
    %v713 = vpop.f32.mrf.mxu0
    %v714 = vadd.f32 %v405, %v713
    %715 = vmatprep.mubr.f32.mxu0 0.0
    %716 = vmatmul.mubr.f32.gmra.mxu0 %v510
    %v717 = vpop.f32.mrf.mxu0
    %v718 = vadd.f32 %v410, %v717
    %v719 = vpop.f32.mrf.mxu0
    %v720 = vadd.f32 %v410, %v719
    %721 = vmatprep.mubr.f32.mxu0 0.0
    %722 = vmatmul.mubr.f32.gmra.mxu0 %v513
    %v723 = vpop.f32.mrf.mxu0
    %v724 = vadd.f32 %v415, %v723
    %v725 = vpop.f32.mrf.mxu0
    %v726 = vadd.f32 %v415, %v725
    %727 = vmatprep.mubr.f32.mxu0 0.0
    %728 = vmatmul.mubr.f32.gmra.mxu0 %v516
    %v729 = vpop.f32.mrf.mxu0
    %v730 = vadd.f32 %v420, %v729
    %v731 = vpop.f32.mrf.mxu0
    %v732 = vadd.f32 %v420, %v731
    %733 = vmatprep.mubr.f32.mxu0 0.0
    %734 = vmatmul.mubr.f32.gmra.mxu0 %v519
    %v735 = vpop.f32.mrf.mxu0
    %v736 = vadd.f32 %v425, %v735
    %v737 = vpop.f32.mrf.mxu0
    %v738 = vadd.f32 %v425, %v737
    %739 = vmatprep.mubr.f32.mxu0 0.0
    %740 = vmatmul.mubr.f32.gmra.mxu0 %v522
    %v741 = vpop.f32.mrf.mxu0
    %v742 = vadd.f32 %v430, %v741
    %v743 = vpop.f32.mrf.mxu0
    %v744 = vadd.f32 %v430, %v743
    %745 = vmatprep.mubr.f32.mxu0 0.0
    %746 = vmatmul.mubr.f32.gmra.mxu0 %v525
    %v747 = vpop.f32.mrf.mxu0
    %v748 = vadd.f32 %v435, %v747
    %v749 = vpop.f32.mrf.mxu0
    %v750 = vadd.f32 %v435, %v749
    %751 = vmatprep.mubr.f32.mxu0 0.0
    %752 = vmatmul.mubr.f32.gmra.mxu0 %v528
    %v753 = vpop.f32.mrf.mxu0
    %v754 = vadd.f32 %v440, %v753
    %v755 = vpop.f32.mrf.mxu0
    %v756 = vadd.f32 %v440, %v755
    %757 = vmatprep.mubr.f32.mxu0 0.0
    %758 = vmatmul.mubr.f32.gmra.mxu0 %v531
    %v759 = vpop.f32.mrf.mxu0
    %v760 = vadd.f32 %v445, %v759
    %v761 = vpop.f32.mrf.mxu0
    %v762 = vadd.f32 %v445, %v761
    %763 = vmatprep.mubr.f32.mxu0 0.0
    %764 = vmatmul.mubr.f32.gmra.mxu0 %v534
    %v765 = vpop.f32.mrf.mxu0
    %v766 = vadd.f32 %v450, %v765
    %v767 = vpop.f32.mrf.mxu0
    %v768 = vadd.f32 %v450, %v767
    %769 = vmatprep.mubr.f32.mxu0 0.0
    %770 = vmatmul.mubr.f32.gmra.mxu0 %v537
    %v771 = vpop.f32.mrf.mxu0
    %v772 = vadd.f32 %v455, %v771
    %v773 = vpop.f32.mrf.mxu0
    %v774 = vadd.f32 %v455, %v773
    %775 = vdwg.mxu0
    %776 = vmatprep.subr.mxu0 0.0
    %777 = vmatpush1.msra.mxu0 0.0
    %778 = vmatprep.subr.mxu0 0.0
    %779 = vmatpush1.msra.mxu0 0.0
    %780 = vmatprep.subr.mxu0 0.0
    %781 = vmatpush1.msra.mxu0 0.0
    %782 = vmatprep.subr.mxu0 0.0
    %783 = vmatpush1.msra.mxu0 0.0
    %784 = vmatprep.subr.mxu0 0.0
    %785 = vmatpush1.msra.mxu0 0.0
    %786 = vmatprep.subr.mxu0 0.0
    %787 = vmatpush1.msra.mxu0 0.0
    %788 = vmatprep.subr.mxu0 0.0
    %789 = vmatpush1.msra.mxu0 0.0
    %790 = vmatprep.subr.mxu0 0.0
    %791 = vmatpush1.msra.mxu0 0.0
    %792 = vmatprep.subr.mxu0 0.0
    %793 = vmatpush1.msra.mxu0 0.0
    %794 = vmatprep.subr.mxu0 0.0
    %795 = vmatpush1.msra.mxu0 0.0
    %796 = vmatprep.subr.mxu0 0.0
    %797 = vmatpush1.msra.mxu0 0.0
    %798 = vmatprep.subr.mxu0 0.0
    %799 = vmatpush1.msra.mxu0 0.0
    %800 = vmatprep.subr.mxu0 0.0
    %801 = vmatpush1.msra.mxu0 %v547
    %802 = vmatprep.subr.mxu0 0.0
    %803 = vmatpush1.msra.mxu0 %v264
    %804 = vmatprep.subr.mxu0 0.0
    %805 = vmatpush1.msra.mxu0 %v261
    %806 = vmatprep.subr.mxu0 0.0
    %807 = vmatpush1.msra.mxu0 %v258
    %808 = vmatprep.subr.mxu0 0.0
    %809 = vmatpush2.msra.mxu0 0.0
    %810 = vmatprep.subr.mxu0 0.0
    %811 = vmatpush2.msra.mxu0 0.0
    %812 = vmatprep.subr.mxu0 0.0
    %813 = vmatpush2.msra.mxu0 0.0
    %814 = vmatprep.subr.mxu0 0.0
    %815 = vmatpush2.msra.mxu0 0.0
    %816 = vmatprep.subr.mxu0 0.0
    %817 = vmatpush2.msra.mxu0 0.0
    %818 = vmatprep.subr.mxu0 0.0
    %819 = vmatpush2.msra.mxu0 0.0
    %820 = vmatprep.subr.mxu0 0.0
    %821 = vmatpush2.msra.mxu0 0.0
    %822 = vmatprep.subr.mxu0 0.0
    %823 = vmatpush2.msra.mxu0 0.0
    %824 = vmatprep.subr.mxu0 0.0
    %825 = vmatpush2.msra.mxu0 0.0
    %826 = vmatprep.subr.mxu0 0.0
    %827 = vmatpush2.msra.mxu0 0.0
    %828 = vmatprep.subr.mxu0 0.0
    %829 = vmatpush2.msra.mxu0 0.0
    %830 = vmatprep.subr.mxu0 0.0
    %831 = vmatpush2.msra.mxu0 0.0
    %832 = vmatprep.subr.mxu0 0.0
    %833 = vmatpush2.msra.mxu0 0.0
    %834 = vmatprep.subr.mxu0 0.0
    %835 = vmatpush2.msra.mxu0 0.0
    %836 = vmatprep.subr.mxu0 0.0
    %837 = vmatpush2.msra.mxu0 0.0
    %838 = vmatprep.subr.mxu0 0.0
    %839 = vmatpush2.msra.mxu0 0.0
    %840 = vmatprep.mubr.f32.mxu0 0.0
    %841 = vmatmul.mubr.f32.gmra.mxu0 %v459
    %v842 = vpop.f32.mrf.mxu0
    %v843 = vadd.f32 %v325, %v842
    %v844 = vpop.f32.mrf.mxu0
    %845 = vmatprep.mubr.f32.mxu0 0.0
    %846 = vmatmul.mubr.f32.gmra.mxu0 %v462
    %v847 = vpop.f32.mrf.mxu0
    %v848 = vadd.f32 %v330, %v847
    %v849 = vpop.f32.mrf.mxu0
    %850 = vmatprep.mubr.f32.mxu0 0.0
    %851 = vmatmul.mubr.f32.gmra.mxu0 %v465
    %v852 = vpop.f32.mrf.mxu0
    %v853 = vadd.f32 %v335, %v852
    %v854 = vpop.f32.mrf.mxu0
    %855 = vmatprep.mubr.f32.mxu0 0.0
    %856 = vmatmul.mubr.f32.gmra.mxu0 %v468
    %v857 = vpop.f32.mrf.mxu0
    %v858 = vadd.f32 %v340, %v857
    %v859 = vpop.f32.mrf.mxu0
    %860 = vmatprep.mubr.f32.mxu0 0.0
    %861 = vmatmul.mubr.f32.gmra.mxu0 %v471
    %v862 = vpop.f32.mrf.mxu0
    %v863 = vadd.f32 %v345, %v862
    %v864 = vpop.f32.mrf.mxu0
    %865 = vmatprep.mubr.f32.mxu0 0.0
    %866 = vmatmul.mubr.f32.gmra.mxu0 %v474
    %v867 = vpop.f32.mrf.mxu0
    %v868 = vadd.f32 %v350, %v867
    %v869 = vpop.f32.mrf.mxu0
    %870 = vmatprep.mubr.f32.mxu0 0.0
    %871 = vmatmul.mubr.f32.gmra.mxu0 %v477
    %v872 = vpop.f32.mrf.mxu0
    %v873 = vadd.f32 %v355, %v872
    %v874 = vpop.f32.mrf.mxu0
    %875 = vmatprep.mubr.f32.mxu0 0.0
    %876 = vmatmul.mubr.f32.gmra.mxu0 %v480
    %v877 = vpop.f32.mrf.mxu0
    %v878 = vadd.f32 %v360, %v877
    %v879 = vpop.f32.mrf.mxu0
    %880 = vmatprep.mubr.f32.mxu0 0.0
    %881 = vmatmul.mubr.f32.gmra.mxu0 %v483
    %v882 = vpop.f32.mrf.mxu0
    %v883 = vadd.f32 %v365, %v882
    %v884 = vpop.f32.mrf.mxu0
    %885 = vmatprep.mubr.f32.mxu0 0.0
    %886 = vmatmul.mubr.f32.gmra.mxu0 %v486
    %v887 = vpop.f32.mrf.mxu0
    %v888 = vadd.f32 %v370, %v887
    %v889 = vpop.f32.mrf.mxu0
    %890 = vmatprep.mubr.f32.mxu0 0.0
    %891 = vmatmul.mubr.f32.gmra.mxu0 %v489
    %v892 = vpop.f32.mrf.mxu0
    %v893 = vadd.f32 %v375, %v892
    %v894 = vpop.f32.mrf.mxu0
    %895 = vmatprep.mubr.f32.mxu0 0.0
    %896 = vmatmul.mubr.f32.gmra.mxu0 %v492
    %v897 = vpop.f32.mrf.mxu0
    %v898 = vadd.f32 %v380, %v897
    %v899 = vpop.f32.mrf.mxu0
    %900 = vmatprep.mubr.f32.mxu0 0.0
    %901 = vmatmul.mubr.f32.gmra.mxu0 %v495
    %v902 = vpop.f32.mrf.mxu0
    %v903 = vadd.f32 %v385, %v902
    %v904 = vpop.f32.mrf.mxu0
    %905 = vmatprep.mubr.f32.mxu0 0.0
    %906 = vmatmul.mubr.f32.gmra.mxu0 %v498
    %v907 = vpop.f32.mrf.mxu0
    %v908 = vadd.f32 %v390, %v907
    %v909 = vpop.f32.mrf.mxu0
    %910 = vmatprep.mubr.f32.mxu0 0.0
    %911 = vmatmul.mubr.f32.gmra.mxu0 %v501
    %v912 = vpop.f32.mrf.mxu0
    %v913 = vadd.f32 %v395, %v912
    %v914 = vpop.f32.mrf.mxu0
    %915 = vmatprep.mubr.f32.mxu0 0.0
    %916 = vmatmul.mubr.f32.gmra.mxu0 %v504
    %v917 = vpop.f32.mrf.mxu0
    %v918 = vadd.f32 %v400, %v917
    %v919 = vpop.f32.mrf.mxu0
    %920 = vmatprep.mubr.f32.mxu0 0.0
    %921 = vmatmul.mubr.f32.gmra.mxu0 %v507
    %v922 = vpop.f32.mrf.mxu0
    %v923 = vadd.f32 %v405, %v922
    %v924 = vpop.f32.mrf.mxu0
    %925 = vmatprep.mubr.f32.mxu0 0.0
    %926 = vmatmul.mubr.f32.gmra.mxu0 %v510
    %v927 = vpop.f32.mrf.mxu0
    %v928 = vadd.f32 %v410, %v927
    %v929 = vpop.f32.mrf.mxu0
    %930 = vmatprep.mubr.f32.mxu0 0.0
    %931 = vmatmul.mubr.f32.gmra.mxu0 %v513
    %v932 = vpop.f32.mrf.mxu0
    %v933 = vadd.f32 %v415, %v932
    %v934 = vpop.f32.mrf.mxu0
    %935 = vmatprep.mubr.f32.mxu0 0.0
    %936 = vmatmul.mubr.f32.gmra.mxu0 %v516
    %v937 = vpop.f32.mrf.mxu0
    %v938 = vadd.f32 %v420, %v937
    %v939 = vpop.f32.mrf.mxu0
    %940 = vmatprep.mubr.f32.mxu0 0.0
    %941 = vmatmul.mubr.f32.gmra.mxu0 %v519
    %v942 = vpop.f32.mrf.mxu0
    %v943 = vadd.f32 %v425, %v942
    %v944 = vpop.f32.mrf.mxu0
    %945 = vmatprep.mubr.f32.mxu0 0.0
    %946 = vmatmul.mubr.f32.gmra.mxu0 %v522
    %v947 = vpop.f32.mrf.mxu0
    %v948 = vadd.f32 %v430, %v947
    %v949 = vpop.f32.mrf.mxu0
    %950 = vmatprep.mubr.f32.mxu0 0.0
    %951 = vmatmul.mubr.f32.gmra.mxu0 %v525
    %v952 = vpop.f32.mrf.mxu0
    %v953 = vadd.f32 %v435, %v952
    %v954 = vpop.f32.mrf.mxu0
    %955 = vmatprep.mubr.f32.mxu0 0.0
    %956 = vmatmul.mubr.f32.gmra.mxu0 %v528
    %v957 = vpop.f32.mrf.mxu0
    %v958 = vadd.f32 %v440, %v957
    %v959 = vpop.f32.mrf.mxu0
    %960 = vmatprep.mubr.f32.mxu0 0.0
    %961 = vmatmul.mubr.f32.gmra.mxu0 %v531
    %v962 = vpop.f32.mrf.mxu0
    %v963 = vadd.f32 %v445, %v962
    %v964 = vpop.f32.mrf.mxu0
    %965 = vmatprep.mubr.f32.mxu0 0.0
    %966 = vmatmul.mubr.f32.gmra.mxu0 %v534
    %v967 = vpop.f32.mrf.mxu0
    %v968 = vadd.f32 %v450, %v967
    %v969 = vpop.f32.mrf.mxu0
    %970 = vmatprep.mubr.f32.mxu0 0.0
    %971 = vmatmul.mubr.f32.gmra.mxu0 %v537
    %v972 = vpop.f32.mrf.mxu0
    %v973 = vadd.f32 %v455, %v972
    %v974 = vpop.f32.mrf.mxu0
    %975 = vdwg.mxu0
    %v976 = vtanh.pop %v616
    %v977 = vtanh.pop %v618
    %v978 = vtanh.pop %v843
    %v979 = vtanh.pop %v622
    %v980 = vtanh.pop %v624
    %v981 = vtanh.pop %v848
    %v982 = vtanh.pop %v628
    %v983 = vtanh.pop %v630
    %v984 = vtanh.pop %v853
    %v985 = vtanh.pop %v634
    %v986 = vtanh.pop %v636
    %v987 = vtanh.pop %v858
    %v988 = vtanh.pop %v640
    %v989 = vtanh.pop %v642
    %v990 = vtanh.pop %v863
    %v991 = vtanh.pop %v646
    %v992 = vtanh.pop %v648
    %v993 = vtanh.pop %v868
    %v994 = vtanh.pop %v652
    %v995 = vtanh.pop %v654
    %v996 = vtanh.pop %v873
    %v997 = vtanh.pop %v658
    %v998 = vtanh.pop %v660
    %v999 = vtanh.pop %v878
    %v1000 = vtanh.pop %v664
    %v1001 = vtanh.pop %v666
    %v1002 = vtanh.pop %v883
    %v1003 = vtanh.pop %v670
    %v1004 = vtanh.pop %v672
    %v1005 = vtanh.pop %v888
    %v1006 = vtanh.pop %v676
    %v1007 = vtanh.pop %v678
    %v1008 = vtanh.pop %v893
    %v1009 = vtanh.pop %v682
    %v1010 = vtanh.pop %v684
    %v1011 = vtanh.pop %v898
    %v1012 = vtanh.pop %v688
    %v1013 = vtanh.pop %v690
    %v1014 = vtanh.pop %v903
    %v1015 = vtanh.pop %v694
    %v1016 = vtanh.pop %v696
    %v1017 = vtanh.pop %v908
    %v1018 = vtanh.pop %v700
    %v1019 = vtanh.pop %v702
    %v1020 = vtanh.pop %v913
    %v1021 = vtanh.pop %v706
    %v1022 = vtanh.pop %v708
    %v1023 = vtanh.pop %v918
    %v1024 = vtanh.pop %v712
    %v1025 = vtanh.pop %v714
    %v1026 = vtanh.pop %v923
    %v1027 = vtanh.pop %v718
    %v1028 = vtanh.pop %v720
    %v1029 = vtanh.pop %v928
    %v1030 = vtanh.pop %v724
    %v1031 = vtanh.pop %v726
    %v1032 = vtanh.pop %v933
    %v1033 = vtanh.pop %v730
    %v1034 = vtanh.pop %v732
    %v1035 = vtanh.pop %v938
    %v1036 = vtanh.pop %v736
    %v1037 = vtanh.pop %v738
    %v1038 = vtanh.pop %v943
    %v1039 = vtanh.pop %v742
    %v1040 = vtanh.pop %v744
    %v1041 = vtanh.pop %v948
    %v1042 = vtanh.pop %v748
    %v1043 = vtanh.pop %v750
    %v1044 = vtanh.pop %v953
    %v1045 = vtanh.pop %v754
    %v1046 = vtanh.pop %v756
    %v1047 = vtanh.pop %v958
    %v1048 = vtanh.pop %v760
    %v1049 = vtanh.pop %v762
    %v1050 = vtanh.pop %v963
    %v1051 = vtanh.pop %v766
    %v1052 = vtanh.pop %v768
    %v1053 = vtanh.pop %v968
    %v1054 = vtanh.pop %v772
    %v1055 = vtanh.pop %v774
    %v1056 = vtanh.pop %v973
    %v1057 = vld [vmem:[%s5] sm:$0x3]
    %v1058 = vld [vmem:[#allocation2] sm:$0x1]
    %1060 = vset.pattern.permute.xlu0 0
    %1061 = vperm.xlu0 %1060, %v1058
    %v1062 = vpop.permute.xlu0 %1061
    %v1064 = vlaneseq
    %v1065 = vshrl.u32 %v1064, 7
    %v1066 = vsub.s32 0, %v1065
    %v1067 = vrot.slane %v1062, %v1066
    %v1069 = vlaneseq
    %v1070 = vshrl.u32 %v1069, 7
    %v1071 = vsub.s32 0, %v1070
    %v1072 = vrot.slane %v1057, %v1071
    %v1073 = vlaneseq
    %v1074 = vshrl.u32 %v1073, 7
    %v1075 = vsub.s32 1, %v1074
    %v1076 = vrot.slane %v1057, %v1075
    %vm1078 = vcmask 670720
    %v1079 = vsel %vm1078, %v1076, 0
    %vm1081 = vcmask 1041408
    %v1083 = vsel %vm1081, %v1054, 0
    %v1086 = vsel %vm1081, %v1055, 0
    %v1089 = vsel %vm1081, %v1056, 0
    %1091 = vmatprep.subr.mxu0 %v1022
    %1092 = vmatpush1.msra.mxu0 %v1021
    %1093 = vmatprep.subr.mxu0 %v1019
    %1094 = vmatpush1.msra.mxu0 %v1018
    %1095 = vmatprep.subr.mxu0 %v1016
    %1096 = vmatpush1.msra.mxu0 %v1015
    %1097 = vmatprep.subr.mxu0 %v1013
    %1098 = vmatpush1.msra.mxu0 %v1012
    %1099 = vmatprep.subr.mxu0 %v1010
    %1100 = vmatpush1.msra.mxu0 %v1009
    %1101 = vmatprep.subr.mxu0 %v1007
    %1102 = vmatpush1.msra.mxu0 %v1006
    %1103 = vmatprep.subr.mxu0 %v1004
    %1104 = vmatpush1.msra.mxu0 %v1003
    %1105 = vmatprep.subr.mxu0 %v1001
    %1106 = vmatpush1.msra.mxu0 %v1000
    %1107 = vmatprep.subr.mxu0 %v998
    %1108 = vmatpush1.msra.mxu0 %v997
    %1109 = vmatprep.subr.mxu0 %v995
    %1110 = vmatpush1.msra.mxu0 %v994
    %1111 = vmatprep.subr.mxu0 %v992
    %1112 = vmatpush1.msra.mxu0 %v991
    %1113 = vmatprep.subr.mxu0 %v989
    %1114 = vmatpush1.msra.mxu0 %v988
    %1115 = vmatprep.subr.mxu0 %v986
    %1116 = vmatpush1.msra.mxu0 %v985
    %1117 = vmatprep.subr.mxu0 %v983
    %1118 = vmatpush1.msra.mxu0 %v982
    %1119 = vmatprep.subr.mxu0 %v980
    %1120 = vmatpush1.msra.mxu0 %v979
    %1121 = vmatprep.subr.mxu0 %v977
    %1122 = vmatpush1.msra.mxu0 %v976
    %1123 = vmatprep.subr.mxu0 0.0
    %1124 = vmatpush2.msra.mxu0 0.0
    %1125 = vmatprep.subr.mxu0 0.0
    %1126 = vmatpush2.msra.mxu0 0.0
    %1127 = vmatprep.subr.mxu0 0.0
    %1128 = vmatpush2.msra.mxu0 0.0
    %1129 = vmatprep.subr.mxu0 0.0
    %1130 = vmatpush2.msra.mxu0 0.0
    %1131 = vmatprep.subr.mxu0 0.0
    %1132 = vmatpush2.msra.mxu0 0.0
    %1133 = vmatprep.subr.mxu0 %v1086
    %1134 = vmatpush2.msra.mxu0 %v1083
    %1135 = vmatprep.subr.mxu0 %v1052
    %1136 = vmatpush2.msra.mxu0 %v1051
    %1137 = vmatprep.subr.mxu0 %v1049
    %1138 = vmatpush2.msra.mxu0 %v1048
    %1139 = vmatprep.subr.mxu0 %v1046
    %1140 = vmatpush2.msra.mxu0 %v1045
    %1141 = vmatprep.subr.mxu0 %v1043
    %1142 = vmatpush2.msra.mxu0 %v1042
    %1143 = vmatprep.subr.mxu0 %v1040
    %1144 = vmatpush2.msra.mxu0 %v1039
    %1145 = vmatprep.subr.mxu0 %v1037
    %1146 = vmatpush2.msra.mxu0 %v1036
    %1147 = vmatprep.subr.mxu0 %v1034
    %1148 = vmatpush2.msra.mxu0 %v1033
    %1149 = vmatprep.subr.mxu0 %v1031
    %1150 = vmatpush2.msra.mxu0 %v1030
    %1151 = vmatprep.subr.mxu0 %v1028
    %1152 = vmatpush2.msra.mxu0 %v1027
    %1153 = vmatprep.subr.mxu0 %v1025
    %1154 = vmatpush2.msra.mxu0 %v1024
    %1155 = vmatprep.mubr.f32.mxu0 %v1079
    %1156 = vmatmul.mubr.f32.gmra.mxu0 %v1072
    %v1157 = vpop.f32.mrf.mxu0
    %v1158 = vadd.f32 %v1067, %v1157
    %v1159 = vpop.f32.mrf.mxu0
    %v1160 = vadd.f32 %v1067, %v1159
    %1161 = vdwg.mxu0
    %1162 = vmatprep.subr.mxu0 0.0
    %1163 = vmatpush1.msra.mxu0 %v1023
    %1164 = vmatprep.subr.mxu0 0.0
    %1165 = vmatpush1.msra.mxu0 %v1020
    %1166 = vmatprep.subr.mxu0 0.0
    %1167 = vmatpush1.msra.mxu0 %v1017
    %1168 = vmatprep.subr.mxu0 0.0
    %1169 = vmatpush1.msra.mxu0 %v1014
    %1170 = vmatprep.subr.mxu0 0.0
    %1171 = vmatpush1.msra.mxu0 %v1011
    %1172 = vmatprep.subr.mxu0 0.0
    %1173 = vmatpush1.msra.mxu0 %v1008
    %1174 = vmatprep.subr.mxu0 0.0
    %1175 = vmatpush1.msra.mxu0 %v1005
    %1176 = vmatprep.subr.mxu0 0.0
    %1177 = vmatpush1.msra.mxu0 %v1002
    %1178 = vmatprep.subr.mxu0 0.0
    %1179 = vmatpush1.msra.mxu0 %v999
    %1180 = vmatprep.subr.mxu0 0.0
    %1181 = vmatpush1.msra.mxu0 %v996
    %1182 = vmatprep.subr.mxu0 0.0
    %1183 = vmatpush1.msra.mxu0 %v993
    %1184 = vmatprep.subr.mxu0 0.0
    %1185 = vmatpush1.msra.mxu0 %v990
    %1186 = vmatprep.subr.mxu0 0.0
    %1187 = vmatpush1.msra.mxu0 %v987
    %1188 = vmatprep.subr.mxu0 0.0
    %1189 = vmatpush1.msra.mxu0 %v984
    %1190 = vmatprep.subr.mxu0 0.0
    %1191 = vmatpush1.msra.mxu0 %v981
    %1192 = vmatprep.subr.mxu0 0.0
    %1193 = vmatpush1.msra.mxu0 %v978
    %1194 = vmatprep.subr.mxu0 0.0
    %1195 = vmatpush2.msra.mxu0 0.0
    %1196 = vmatprep.subr.mxu0 0.0
    %1197 = vmatpush2.msra.mxu0 0.0
    %1198 = vmatprep.subr.mxu0 0.0
    %1199 = vmatpush2.msra.mxu0 0.0
    %1200 = vmatprep.subr.mxu0 0.0
    %1201 = vmatpush2.msra.mxu0 0.0
    %1202 = vmatprep.subr.mxu0 0.0
    %1203 = vmatpush2.msra.mxu0 0.0
    %1204 = vmatprep.subr.mxu0 0.0
    %1205 = vmatpush2.msra.mxu0 %v1089
    %1206 = vmatprep.subr.mxu0 0.0
    %1207 = vmatpush2.msra.mxu0 %v1053
    %1208 = vmatprep.subr.mxu0 0.0
    %1209 = vmatpush2.msra.mxu0 %v1050
    %1210 = vmatprep.subr.mxu0 0.0
    %1211 = vmatpush2.msra.mxu0 %v1047
    %1212 = vmatprep.subr.mxu0 0.0
    %1213 = vmatpush2.msra.mxu0 %v1044
    %1214 = vmatprep.subr.mxu0 0.0
    %1215 = vmatpush2.msra.mxu0 %v1041
    %1216 = vmatprep.subr.mxu0 0.0
    %1217 = vmatpush2.msra.mxu0 %v1038
    %1218 = vmatprep.subr.mxu0 0.0
    %1219 = vmatpush2.msra.mxu0 %v1035
    %1220 = vmatprep.subr.mxu0 0.0
    %1221 = vmatpush2.msra.mxu0 %v1032
    %1222 = vmatprep.subr.mxu0 0.0
    %1223 = vmatpush2.msra.mxu0 %v1029
    %1224 = vmatprep.subr.mxu0 0.0
    %1225 = vmatpush2.msra.mxu0 %v1026
    %1226 = vmatprep.mubr.f32.mxu0 %v1079
    %1227 = vmatmul.mubr.f32.gmra.mxu0 %v1072
    %v1228 = vpop.f32.mrf.mxu0
    %v1229 = vadd.f32 %v1067, %v1228
    %v1230 = vpop.f32.mrf.mxu0
    %1231 = vdwg.mxu0
    %v1235 = vcombine.low %v1158, %v1160
    %v1237 = vunpack.c.l.s4 1966171168
    %v1238 = vunpack.c.0.s8 %v1237
    %v1239 = vlaneseq
    %v1240 = vshrl.u32 %v1239, 7
    %v1241 = vsub.s32 %v1238, %v1240
    %v1242 = vrot.slane %v1235, %v1241
    %v1244 = vunpack.c.l.s4 1966171168
    %v1245 = vunpack.c.0.s8 %v1244
    %v1246 = vlaneseq
    %v1247 = vshrl.u32 %v1246, 7
    %v1248 = vsub.s32 %v1245, %v1247
    %v1249 = vrot.slane %v1229, %v1248
    %v1250 = vcombine.low %v1242, %v1249
    %v1252 = vunpack.c.l.s4 1966171168
    %v1253 = vunpack.c.0.s8 %v1252
    %v1254 = vlaneseq
    %v1255 = vshrl.u32 %v1254, 7
    %v1256 = vsub.s32 %v1253, %v1255
    %v1257 = vrot.slane %v1250, %v1256
    %v1259 = vlaneseq
    %vm1260 = vcmp.ge.s32.totalorder %v1259, 0
    %vm1261 = vcmp.lt.s32.totalorder %v1259, 384
    %vm1262 = vmand %vm1260, %vm1261
    %1263 = vst.msk [vmem:[#allocation3] sm:$0x7] %vm1262, %v1257
    // Predicated region
    $region30: #{tpu_custom_call.1} parent=1 // pred_check
      _
    $region31: #{tpu_custom_call.1} parent=1 // pred_check_branch
      %1265 = sbr.rel (0) target = $region33
    $region32: #{tpu_custom_call.1} parent=1 // pred_region
      %s1267 = ssub.s32 48, 48
      %1268 = vsyncadd [#allocation4], %s1267
      %s1270 = sshll.u32 [#allocation3], 4
      %s1271 = int_to_ptr.vmem [resolvable:$true] %s1270
      %1273 = dma.vmem_to_hbm [thread:$0]  %s1271, 48, %s7, [#allocation4]
    $region33: #{tpu_custom_call.1} parent=1 // pred_fallthru
      _
    // Predicated region
    $region34: #{tpu_custom_call.1} parent=1 // pred_check
      _
    $region35: #{tpu_custom_call.1} parent=1 // pred_check_branch
      %1275 = sbr.rel (0) target = $region37
    $region36: #{tpu_custom_call.1} parent=1 // pred_region
      %1276 = dma.done [#allocation4], 48
    $region37: #{tpu_custom_call.1} parent=1 // pred_fallthru
      _
    %1277 = vsyncpa [#allocation4], 1

</llo_original>
